<compile_context>
chip_gen: v7x
topology: tpu7x:2x2x1
jax: 0.10.0
libtpu: 0.0.40
codegen_flags: <defaults>
</compile_context>

<pallas_src>
import functools

import jax
import jax.numpy as jnp
from jax.experimental import pallas as pl
from jax.experimental.pallas import tpu as pltpu

_LANE = 128  # lane width (last-dim tiling)


def _fused_linear_kernel(x_ref, w_ref, b_ref, o_ref):
    # Single MXU contraction with f32 accumulation; bias row broadcasts over
    # the batch tile; lane-dense (multiple-of-128 wide) store.
    acc = jnp.dot(x_ref[...], w_ref[...], preferred_element_type=jnp.float32)
    o_ref[...] = (acc + b_ref[...]).astype(o_ref.dtype)


def _round_up(x, m):
    return ((x + m - 1) // m) * m


def _sublane_multiple(dtype):
    # Rows per packed-sublane group: f32 -> 8, bf16 -> 16, int8/fp8 -> 32.
    return max(8, 32 // jnp.dtype(dtype).itemsize)


def fuse_feat_classifier_two_params(w0, b0, w1, b1):
    """Fold fc0 and fc1 into one linear layer.  Call once at weight-load time.

    w0: (bottleneck, input_dim)  b0: (bottleneck,)   (PyTorch nn.Linear layout)
    w1: (class_num, bottleneck)  b1: (class_num,)
    Returns (w_fused (input_dim, class_num) f32, b_fused (1, class_num) f32).
    """
    w0f = w0.astype(jnp.float32)
    w1f = w1.astype(jnp.float32)
    w_fused = jnp.dot(w0f.T, w1f.T, preferred_element_type=jnp.float32)
    b_fused = (jnp.dot(b0.astype(jnp.float32)[None, :], w1f.T,
                       preferred_element_type=jnp.float32)
               + b1.astype(jnp.float32)[None, :])
    return w_fused, b_fused


@functools.partial(jax.jit, static_argnames=("block_b", "compute_dtype"))
def feat_classifier_two_forward(x, w_fused, b_fused, *, block_b=512,
                                compute_dtype=None):
    """Hot-path forward: out = x @ w_fused + b_fused, via one Pallas GEMM.

    x       : (B, input_dim)
    w_fused : (input_dim, class_num)  f32  (from fuse_feat_classifier_two_params)
    b_fused : (1, class_num)          f32
    compute_dtype: optional operand dtype (e.g. jnp.bfloat16 — valid on
      v5e/v6e/v7x); accumulation and bias stay f32, output keeps x's dtype.
    """
    B, d_in = x.shape
    cls = w_fused.shape[1]
    out_dtype = x.dtype

    if compute_dtype is not None:
        x = x.astype(compute_dtype)
        w_fused = w_fused.astype(compute_dtype)

    sub = _sublane_multiple(x.dtype)

    # Batch tile: at most block_b rows, sublane-aligned for the compute dtype,
    # and chosen so it divides the padded batch exactly (no OOB last block).
    tb = min(_round_up(block_b, sub), _round_up(B, sub))
    b_pad = _round_up(B, tb)
    # Output width padded to a lane multiple -> unmasked full-width stores.
    n_pad = _round_up(max(cls, _LANE), _LANE)

    # K (d_in) stays un-padded: full-extent last-dim block is legal.
    x_p = jnp.pad(x, ((0, b_pad - B), (0, 0))) if b_pad != B else x
    w_p = jnp.pad(w_fused, ((0, 0), (0, n_pad - cls))) if n_pad != cls else w_fused
    b_p = jnp.pad(b_fused, ((0, 0), (0, n_pad - cls))) if n_pad != cls else b_fused

    grid = (b_pad // tb,)

    in_itemsize = jnp.dtype(x_p.dtype).itemsize
    out_itemsize = jnp.dtype(out_dtype).itemsize
    cost = pl.CostEstimate(
        flops=2 * b_pad * d_in * n_pad,
        transcendentals=0,
        bytes_accessed=(b_pad * d_in + d_in * n_pad) * in_itemsize
        + n_pad * 4
        + b_pad * n_pad * out_itemsize,
    )

    out_padded = pl.pallas_call(
        _fused_linear_kernel,
        out_shape=jax.ShapeDtypeStruct((b_pad, n_pad), out_dtype),
        grid_spec=pltpu.PrefetchScalarGridSpec(
            num_scalar_prefetch=0,
            grid=grid,
            in_specs=[
                pl.BlockSpec((tb, d_in), lambda i: (i, 0)),      # x row tile (K un-padded)
                pl.BlockSpec((d_in, n_pad), lambda i: (0, 0)),   # fused weight (resident)
                pl.BlockSpec((1, n_pad), lambda i: (0, 0)),      # fused bias (resident)
            ],
            out_specs=pl.BlockSpec((tb, n_pad), lambda i: (i, 0)),
        ),
        compiler_params=pltpu.CompilerParams(
            dimension_semantics=("parallel",),
        ),
        cost_estimate=cost,
    )(x_p, w_p, b_p)

    # Slice the lane/batch padding off inside the same jit (fuses with the
    # kernel epilogue).  Consumers that can take a lane-dense (b_pad, n_pad)
    # slab directly could skip this to save one HBM pass at very large B.
    return out_padded[:B, :cls]


def _xavier_normal(key, out_f, in_f, dtype=jnp.float32):
    # Matches torch.nn.init.xavier_normal_ (gain=1): std = sqrt(2/(fan_in+fan_out))
    std = (2.0 / (in_f + out_f)) ** 0.5
    return std * jax.random.normal(key, (out_f, in_f), dtype=dtype)


if __name__ == "__main__":
    # Shapes consistent with the module: input_dim=32, bottleneck=256, class_num=16
    B, input_dim, bottleneck_dim, class_num = 8, 32, 256, 16

    key = jax.random.PRNGKey(0)
    kx, k0, k1 = jax.random.split(key, 3)

    x = jax.random.normal(kx, (B, input_dim), dtype=jnp.float32)
    # init_weights: Linear -> xavier_normal weight, zero bias
    w0 = _xavier_normal(k0, bottleneck_dim, input_dim)
    b0 = jnp.zeros((bottleneck_dim,), jnp.float32)
    w1 = _xavier_normal(k1, class_num, bottleneck_dim)
    b1 = jnp.zeros((class_num,), jnp.float32)

    # Reference in plain JAX (same math as the PyTorch forward).
    ref = (x @ w0.T + b0) @ w1.T + b1

    # Weight-load time: fuse once and cache (NOT in the per-call hot path).
    w_fused, b_fused = fuse_feat_classifier_two_params(w0, b0, w1, b1)
    w_fused, b_fused = jax.block_until_ready((w_fused, b_fused))

    # f32 path — tight numeric check + exact argmax agreement.
    out = feat_classifier_two_forward(x, w_fused, b_fused)
    out = jax.block_until_ready(out)
    assert out.shape == (B, class_num)
    assert jnp.allclose(out, ref, atol=1e-4, rtol=1e-4)
    assert jnp.array_equal(jnp.argmax(out, axis=-1), jnp.argmax(ref, axis=-1))

    # bf16 operand path (valid on v5e/v6e/v7x); f32 accumulation inside.
    # For classification deployments, validate argmax agreement on real data —
    # allclose at 1e-1 alone can hide logit-margin shifts.
    out_bf16 = feat_classifier_two_forward(x, w_fused, b_fused,
                                           compute_dtype=jnp.bfloat16)
    out_bf16 = jax.block_until_ready(out_bf16)
    assert out_bf16.shape == (B, class_num)
    assert jnp.allclose(out_bf16, ref, atol=1e-1, rtol=1e-1)

    print("KERNEL_OK")
</pallas_src>

<mosaic_0001>
module attributes {stable_mosaic.version = 11 : i64} {
  func.func @_fused_linear_kernel(%arg0: i32, %arg1: memref<8x32xf32, #tpu.memory_space<vmem>>, %arg2: memref<32x128xf32, #tpu.memory_space<vmem>>, %arg3: memref<1x128xf32, #tpu.memory_space<vmem>>, %arg4: memref<8x128xf32, #tpu.memory_space<vmem>>) attributes {dimension_semantics = [#tpu.dimension_semantics<parallel>], iteration_bounds = array<i64: 1>, scalar_prefetch = 0 : i64, scratch_operands = 0 : i64, tpu.core_type = #tpu.core_type<tc>, window_params = [{transform_indices = @transform_0, window_bounds = array<i64: 8, 32>}, {pipeline_mode = #tpu.pipeline_mode<synchronous>, transform_indices = @transform_1, window_bounds = array<i64: 32, 128>}, {pipeline_mode = #tpu.pipeline_mode<synchronous>, transform_indices = @transform_2, window_bounds = array<i64: 1, 128>}, {transform_indices = @transform_3, window_bounds = array<i64: 8, 128>}]} {
    %c0 = arith.constant 0 : index
    %c0_0 = arith.constant 0 : index
    %0 = vector.load %arg1[%c0, %c0_0] : memref<8x32xf32, #tpu.memory_space<vmem>>, vector<8x32xf32>
    %c0_1 = arith.constant 0 : index
    %c0_2 = arith.constant 0 : index
    %1 = vector.load %arg2[%c0_1, %c0_2] : memref<32x128xf32, #tpu.memory_space<vmem>>, vector<32x128xf32>
    %cst = arith.constant dense<0.000000e+00> : vector<8x128xf32>
    %2 = tpu.matmul %0, %1, %cst {dimension_numbers = #tpu.dot_dimension_numbers<[1], [0], [0], [1], [0, 0, 1, 1], [], []>} : vector<8x32xf32>, vector<32x128xf32>, vector<8x128xf32> -> vector<8x128xf32>
    %c0_3 = arith.constant 0 : index
    %c0_4 = arith.constant 0 : index
    %3 = vector.load %arg3[%c0_3, %c0_4] : memref<1x128xf32, #tpu.memory_space<vmem>>, vector<1x128xf32>
    %4 = vector.broadcast %3 : vector<1x128xf32> to vector<8x128xf32>
    %5 = arith.addf %2, %4 : vector<8x128xf32>
    %c0_5 = arith.constant 0 : index
    %c0_6 = arith.constant 0 : index
    %6 = vector.load %arg4[%c0_5, %c0_6] : memref<8x128xf32, #tpu.memory_space<vmem>>, vector<8x128xf32>
    tpu.vector_store %arg4[%c0_5, %c0_6], %5 {strides = array<i32>} : memref<8x128xf32, #tpu.memory_space<vmem>>, vector<8x128xf32>,
    return
  }
  func.func @transform_0(%arg0: i32) -> (i32, i32) {
    %c0_i32 = arith.constant 0 : i32
    %c0_i32_0 = arith.constant 0 : i32
    return %arg0, %c0_i32 : i32, i32
  }
  func.func @transform_1(%arg0: i32) -> (i32, i32) {
    %c0_i32 = arith.constant 0 : i32
    %c0_i32_0 = arith.constant 0 : i32
    %c0_i32_1 = arith.constant 0 : i32
    return %c0_i32, %c0_i32_0 : i32, i32
  }
  func.func @transform_2(%arg0: i32) -> (i32, i32) {
    %c0_i32 = arith.constant 0 : i32
    %c0_i32_0 = arith.constant 0 : i32
    %c0_i32_1 = arith.constant 0 : i32
    return %c0_i32, %c0_i32_0 : i32, i32
  }
  func.func @transform_3(%arg0: i32) -> (i32, i32) {
    %c0_i32 = arith.constant 0 : i32
    %c0_i32_0 = arith.constant 0 : i32
    return %arg0, %c0_i32 : i32, i32
  }
}

</mosaic_0001>

<llo_original>
// kernel: feat_classifier_two_forward.1
$region0: #{feat_classifier_two_forward.1}
  #allocation0 [shape = 'u32[]', space=smem, size = 0x4, offset = 0x4, fixed_abs, tag = 'smem constant byte address 0x4 - core index']
  #allocation1 [shape = 'u32[144,128]{1,0:T(1,128)}', space=vmem, size = 0x12000, scoped, tag = 'internal scratch']
  %s0 = inlined_call_operand.vmem [shape: f32[8,32], index: 0, kind: input, shape index: {}]
  %s1 = inlined_call_operand.vmem [shape: f32[32,128], index: 1, kind: input, shape index: {}]
  %s2 = inlined_call_operand.vmem [shape: f32[1,128], index: 2, kind: input, shape index: {}]
  %s3 = inlined_call_operand.hbm [shape: f32[8,128], index: 3, kind: output, shape index: {}]
  %s4 = sld [smem:[#allocation0]]
  $region22: #{feat_classifier_two_forward.1} parent=0
    _
  %s6 = ssub.s32 1, %s4
  %s7 = scalar_select 0, %s6, %s4
  $region1: #{feat_classifier_two_forward.1} parent=0
    #allocation2 [shape = 'u8[4096]{0}', space=vmem, size = 0x1000, scoped, tag = 'output window, operand 0, single buffered']
    #allocation3 [shape = 's32[1]{0}', space=sflag, size = 0x4, scoped, tag = 'scoped memory for feat_classifier_two_forward.1']
    %8 = vsyncpa [#allocation3], 0
    // Predicated region
    $region2: #{feat_classifier_two_forward.1} parent=1 // pred_check
      _
    $region3: #{feat_classifier_two_forward.1} parent=1 // pred_check_branch
      %10 = sbr.rel (0) target = $region5
    $region4: #{feat_classifier_two_forward.1} parent=1 // pred_region
      _
    $region5: #{feat_classifier_two_forward.1} parent=1 // pred_fallthru
      _
    // Predicated region
    $region6: #{feat_classifier_two_forward.1} parent=1 // pred_check
      _
    $region7: #{feat_classifier_two_forward.1} parent=1 // pred_check_branch
      %12 = sbr.rel (0) target = $region9
    $region8: #{feat_classifier_two_forward.1} parent=1 // pred_region
      _
    $region9: #{feat_classifier_two_forward.1} parent=1 // pred_fallthru
      _
    // Predicated region
    $region10: #{feat_classifier_two_forward.1} parent=1 // pred_check
      _
    $region11: #{feat_classifier_two_forward.1} parent=1 // pred_check_branch
      %14 = sbr.rel (0) target = $region13
    $region12: #{feat_classifier_two_forward.1} parent=1 // pred_region
      _
    $region13: #{feat_classifier_two_forward.1} parent=1 // pred_fallthru
      _
    %v15 = vld [vmem:[%s0] sm:$0xff]
    %v16 = vld [vmem:[%s1] sm:$0xff]
    %v17 = vld [vmem:[%s1 + $0x8] sm:$0xff]
    %v18 = vld [vmem:[%s1 + $0x10] sm:$0xff]
    %v19 = vld [vmem:[%s1 + $0x18] sm:$0xff]
    %v20 = vld [vmem:[%s2] sm:$0x1]
    %v22 = vlaneseq
    %v23 = vshrl.u32 %v22, 7
    %v24 = vsub.s32 0, %v23
    %v25 = vrot.slane %v20, %v24
    %vm27 = vcmask 261120
    %v29 = vsel %vm27, %v15, 0
    %31 = vmatprep.subr.mxu0 0.0
    %32 = vmatpush1.msra.mxu0 %v16
    %33 = vmatprep.subr.mxu0 0.0
    %34 = vmatpush1.msra.mxu0 %v17
    %35 = vmatprep.subr.mxu0 0.0
    %36 = vmatpush1.msra.mxu0 %v18
    %37 = vmatprep.subr.mxu0 0.0
    %38 = vmatpush1.msra.mxu0 %v19
    %39 = vmatprep.subr.mxu0 0.0
    %40 = vmatpush1.msra.mxu0 0.0
    %41 = vmatprep.subr.mxu0 0.0
    %42 = vmatpush1.msra.mxu0 0.0
    %43 = vmatprep.subr.mxu0 0.0
    %44 = vmatpush1.msra.mxu0 0.0
    %45 = vmatprep.subr.mxu0 0.0
    %46 = vmatpush1.msra.mxu0 0.0
    %47 = vmatprep.subr.mxu0 0.0
    %48 = vmatpush1.msra.mxu0 0.0
    %49 = vmatprep.subr.mxu0 0.0
    %50 = vmatpush1.msra.mxu0 0.0
    %51 = vmatprep.subr.mxu0 0.0
    %52 = vmatpush1.msra.mxu0 0.0
    %53 = vmatprep.subr.mxu0 0.0
    %54 = vmatpush1.msra.mxu0 0.0
    %55 = vmatprep.subr.mxu0 0.0
    %56 = vmatpush1.msra.mxu0 0.0
    %57 = vmatprep.subr.mxu0 0.0
    %58 = vmatpush1.msra.mxu0 0.0
    %59 = vmatprep.subr.mxu0 0.0
    %60 = vmatpush1.msra.mxu0 0.0
    %61 = vmatprep.subr.mxu0 0.0
    %62 = vmatpush1.msra.mxu0 0.0
    %63 = vmatprep.subr.mxu0 0.0
    %64 = vmatpush1.msra.mxu0 0.0
    %65 = vmatprep.subr.mxu0 0.0
    %66 = vmatpush1.msra.mxu0 0.0
    %67 = vmatprep.subr.mxu0 0.0
    %68 = vmatpush1.msra.mxu0 0.0
    %69 = vmatprep.subr.mxu0 0.0
    %70 = vmatpush1.msra.mxu0 0.0
    %71 = vmatprep.subr.mxu0 0.0
    %72 = vmatpush1.msra.mxu0 0.0
    %73 = vmatprep.subr.mxu0 0.0
    %74 = vmatpush1.msra.mxu0 0.0
    %75 = vmatprep.subr.mxu0 0.0
    %76 = vmatpush1.msra.mxu0 0.0
    %77 = vmatprep.subr.mxu0 0.0
    %78 = vmatpush1.msra.mxu0 0.0
    %79 = vmatprep.subr.mxu0 0.0
    %80 = vmatpush1.msra.mxu0 0.0
    %81 = vmatprep.subr.mxu0 0.0
    %82 = vmatpush1.msra.mxu0 0.0
    %83 = vmatprep.subr.mxu0 0.0
    %84 = vmatpush1.msra.mxu0 0.0
    %85 = vmatprep.subr.mxu0 0.0
    %86 = vmatpush1.msra.mxu0 0.0
    %87 = vmatprep.subr.mxu0 0.0
    %88 = vmatpush1.msra.mxu0 0.0
    %89 = vmatprep.subr.mxu0 0.0
    %90 = vmatpush1.msra.mxu0 0.0
    %91 = vmatprep.subr.mxu0 0.0
    %92 = vmatpush1.msra.mxu0 0.0
    %93 = vmatprep.subr.mxu0 0.0
    %94 = vmatpush1.msra.mxu0 0.0
    %95 = vmatprep.mubr.f32.mxu0 0.0
    %96 = vmatmul.mubr.f32.gmra.mrb[0].mxu0 %v29
    %v97 = vpop.f32.mrb[0].mxu0
    %v98 = vadd.f32 %v25, %v97
    %v99 = vpop.f32.mrb[0].mxu0
    %100 = vdwg.mxu0
    %101 = vst [vmem:[#allocation2] sm:$0xff] %v98
    // Predicated region
    $region14: #{feat_classifier_two_forward.1} parent=1 // pred_check
      _
    $region15: #{feat_classifier_two_forward.1} parent=1 // pred_check_branch
      %103 = sbr.rel (0) target = $region17
    $region16: #{feat_classifier_two_forward.1} parent=1 // pred_region
      %s105 = ssub.s32 128, 128
      %106 = vsyncadd [#allocation3], %s105
      %s108 = sshll.u32 [#allocation2], 4
      %s109 = int_to_ptr.vmem [resolvable:$true] %s108
      %111 = dma.vmem_to_hbm [thread:$0]  %s109, 128, %s3, [#allocation3]
    $region17: #{feat_classifier_two_forward.1} parent=1 // pred_fallthru
      _
    // Predicated region
    $region18: #{feat_classifier_two_forward.1} parent=1 // pred_check
      _
    $region19: #{feat_classifier_two_forward.1} parent=1 // pred_check_branch
      %113 = sbr.rel (0) target = $region21
    $region20: #{feat_classifier_two_forward.1} parent=1 // pred_region
      %114 = dma.done [#allocation3], 128
    $region21: #{feat_classifier_two_forward.1} parent=1 // pred_fallthru
      _
    %115 = vsyncpa [#allocation3], 1

</llo_original>
